<compile_context>
chip_gen: v6e
topology: v6e:2x2x1
jax: 0.10.0
libtpu: 0.0.40
codegen_flags: <defaults>
</compile_context>

<pallas_src>
import math
import numpy as np
import jax
import jax.numpy as jnp
from jax.experimental import pallas as pl
from jax.experimental.pallas import tpu as pltpu

GAUSSIAN_MEMBERSHIPS = [
    (-1.645, 0.283), (-1.08, 0.17), (-0.739, 0.134), (-0.468, 0.118),
    (-0.228, 0.114), (0.0, 0.114), (0.228, 0.114), (0.468, 0.118),
    (0.739, 0.134), (1.08, 0.17), (1.645, 0.283),
]
EPSILON = 1e-7


def _fold_gaussian_coeffs(epsilon):
    """memb_g(x) = log_prob_g(x)/log_prob_g(m_g) = a_g*x^2 + b_g*x + c_g (exact).

    log_prob_g(x) = -0.5*((x-m)/s)^2 - log(s*sqrt(2*pi));  log_prob_g(m) = -log(s*sqrt(2*pi)).
    The numerator epsilon of the normalization is folded into c_eps; the
    normalizer sum_g memb_g(x) = A*x^2 + B*x + C is returned in closed form.
    """
    a, b, c_eps = [], [], []
    A = B = C = 0.0
    for m, s in GAUSSIAN_MEMBERSHIPS:
        log_norm = math.log(s * math.sqrt(2.0 * math.pi))
        ag = 0.5 / (s * s * log_norm)
        bg = -2.0 * ag * m
        cg = ag * m * m + 1.0
        a.append(ag)
        b.append(bg)
        c_eps.append(cg + epsilon)
        A += ag
        B += bg
        C += cg
    return a, b, c_eps, A, B, C


def _make_kernel(d, tm, tc, n_mols_pad, total_atoms, epsilon, poly):
    A, B, C = poly
    C_eps = C + epsilon
    n_chunks = tm // tc          # tm is a multiple of tc by construction

    def kernel(x_ref, split_ref, wt_ref, b_ref, o_ref, acc_scr):
        i = pl.program_id(0)

        @pl.when(i == 0)
        def _init():
            acc_scr[...] = jnp.zeros_like(acc_scr)

        # ---- per-chunk: 3 moment planes + one-hot scatter as an MXU dot ----
        def chunk(c, carry):
            off = pl.multiple_of(c * tc, tc)                      # lane-aligned start
            lane = jax.lax.broadcasted_iota(jnp.int32, (1, tc), 1)
            valid = (i * tm + off + lane) < total_atoms           # (1, tc) narrow mask

            # Atom features, atoms on the 128-lane axis; scrub ragged garbage
            # (NaN/Inf-safe) and cast from the upstream dtype in-kernel.
            x = jnp.where(valid, x_ref[:, pl.ds(off, tc)].astype(jnp.float32), 0.0)
            x2 = x * x
            # Closed-form normalizer; exact reciprocal (EUP path, off the VALU).
            inv = pl.reciprocal(A * x2 + B * x + C_eps)           # (d, tc)
            # Three folded moment planes; d is a multiple of 8 sublanes for
            # typical conv_out_depth, so this concat is pure vreg stacking.
            planes = jnp.concatenate([x2 * inv, x * inv, inv], axis=0)   # (3d, tc)

            # One-hot molecule matrix (molecules on sublanes, atoms on lanes).
            # Invalid atoms get id == n_mols_pad -> match no row (no wide mask).
            split_c = jnp.where(valid, split_ref[:, pl.ds(off, tc)], n_mols_pad)
            mol = jax.lax.broadcasted_iota(jnp.int32, (n_mols_pad, tc), 0)
            onehot = (mol == split_c).astype(jnp.float32)          # (n_mols_pad, tc)
            # NOTE(v5e): casting onehot/planes to bf16 here is ~4x MXU throughput;
            # kept f32 since the MXU is far from the bottleneck at these shapes.

            # Scatter_add over this chunk's atoms as a single MXU contraction
            # (K = tc atoms):  acc[m, k] += sum_a onehot[m, a] * planes[k, a].
            acc_scr[...] += jax.lax.dot_general(
                onehot, planes,
                dimension_numbers=(((1,), (1,)), ((), ())),
                preferred_element_type=jnp.float32)
            return carry

        jax.lax.fori_loop(0, n_chunks, chunk, 0, unroll=True)

        # ---- finalize once: folded Linear + bias + tanh, lane-dense output ----
        @pl.when(i == pl.num_programs(0) - 1)
        def _finalize():
            out = jnp.dot(acc_scr[...], wt_ref[...],
                          preferred_element_type=jnp.float32)      # (n_mols_pad, n_depth)
            o_ref[...] = jnp.tanh(out + b_ref[...]).astype(o_ref.dtype)

    return kernel


def weave_gather(outputs, pair_features, atom_split, n_mols, w, b, *,
                 gaussian_expand=True, epsilon=EPSILON, tm=2048):
    """WeaveGather forward.

    outputs:      [total_atoms, conv_out_depth] atom features
    atom_split:   [total_atoms] int molecule id per atom (any order)
    n_mols:       number of molecules (== atom_split.max() + 1)
    w, b:         Linear(conv_out_depth*11 -> n_depth) params in torch layout:
                  w [n_depth, conv_out_depth*11], b [n_depth]
    Returns (output_molecules [n_mols, n_depth], pair_features).
    (The torch forward's 4th input is unused, mirroring the reference module.)
    """
    atom_split = jnp.asarray(atom_split, jnp.int32)
    outputs = jnp.asarray(outputs)

    if not gaussian_expand:
        # Spec: plain scatter_add, no linear / activation.  Trivial memory-bound
        # segment sum -> plain JAX (nothing to fuse).
        seg = jax.ops.segment_sum(outputs, atom_split, num_segments=n_mols)
        return seg, pair_features

    total_atoms, d = outputs.shape
    n_g = len(GAUSSIAN_MEMBERSHIPS)
    n_depth = w.shape[0]

    tm = max(128, ((int(tm) + 127) // 128) * 128)       # lane-aligned atom tile
    tc = 256 if tm % 256 == 0 else tm                   # elementwise chunk (vreg budget)
    n_mols_pad = max(8, ((int(n_mols) + 7) // 8) * 8)   # sublane-aligned molecules
    # NOTE: assumes n_mols is modest (one-hot chunk + accumulator fit VMEM/vregs);
    # very large molecule batches would need the molecule axis tiled too (v7x: 64 MiB).

    # Feature-major (lane-dense) atom features: atoms live on the 128-lane axis.
    # Kept in the upstream dtype (cast happens in-kernel).
    x_t = jnp.transpose(outputs)                         # (d, N)
    split_2d = atom_split.reshape(1, total_atoms)

    # Fold the 11-gaussian expansion into the Linear weight (torch flat index =
    # d'*11 + g):  W2/W1/W0[o, d'] = sum_g {a_g, b_g, c_g+eps} * w[o, d'*11+g].
    a_g, b_g, c_eps_g, A, B, C = _fold_gaussian_coeffs(epsilon)
    w3 = jnp.asarray(w, jnp.float32).reshape(n_depth, d, n_g)
    W2 = jnp.einsum('odg,g->od', w3, jnp.asarray(a_g, jnp.float32))
    W1 = jnp.einsum('odg,g->od', w3, jnp.asarray(b_g, jnp.float32))
    W0 = jnp.einsum('odg,g->od', w3, jnp.asarray(c_eps_g, jnp.float32))
    w_fold_t = jnp.concatenate([W2, W1, W0], axis=1).T   # (3d, n_depth), matches plane order
    bias_row = jnp.asarray(b, jnp.float32).reshape(1, n_depth)

    kernel = _make_kernel(d, tm, tc, n_mols_pad, total_atoms, epsilon, (A, B, C))

    out = pl.pallas_call(
        kernel,
        out_shape=jax.ShapeDtypeStruct((n_mols_pad, n_depth), jnp.float32),
        grid_spec=pltpu.PrefetchScalarGridSpec(
            num_scalar_prefetch=0,
            grid=(pl.cdiv(total_atoms, tm),),
            in_specs=[
                pl.BlockSpec((d, tm), lambda i: (0, i)),               # x (feature-major)
                pl.BlockSpec((1, tm), lambda i: (0, i)),               # atom_split
                pl.BlockSpec((3 * d, n_depth), lambda i: (0, 0)),      # folded weight^T
                pl.BlockSpec((1, n_depth), lambda i: (0, 0)),          # bias row
            ],
            out_specs=pl.BlockSpec((n_mols_pad, n_depth), lambda i: (0, 0)),
            scratch_shapes=[
                pltpu.VMEM((n_mols_pad, 3 * d), jnp.float32),          # per-molecule acc
            ],
        ),
        # Atom axis accumulates into the persistent VMEM accumulator -> sequential.
        # TODO(synk): v7x: split the atom axis across the two TensorCores with
        # per-core partial accumulators + an epilogue reduce.
        compiler_params=pltpu.CompilerParams(
            dimension_semantics=("arbitrary",)),
    )(x_t, split_2d, w_fold_t, bias_row)

    return out[:n_mols], pair_features


def _reference(x, atom_split, n_mols, w, b, epsilon):
    """Pure numpy (float64) mirror of the torch WeaveGather forward."""
    x = np.asarray(x, np.float64)
    m = np.array([mm for mm, _ in GAUSSIAN_MEMBERSHIPS], np.float64)
    s = np.array([ss for _, ss in GAUSSIAN_MEMBERSHIPS], np.float64)
    log_norm = np.log(s * np.sqrt(2.0 * np.pi))
    lp = -0.5 * ((x[:, :, None] - m) / s) ** 2 - log_norm        # (N, D, 11)
    memb = lp / (-log_norm)                                      # / log_prob(mean)
    memb = (memb + epsilon) / (memb.sum(axis=2, keepdims=True) + epsilon)
    flat = memb.reshape(x.shape[0], -1)                          # (N, D*11), idx d*11+g
    mols = np.zeros((n_mols, flat.shape[1]), np.float64)
    np.add.at(mols, np.asarray(atom_split), flat)                # scatter_add
    z = mols @ np.asarray(w, np.float64).T + np.asarray(b, np.float64)
    return np.tanh(z)


if __name__ == "__main__":
    key = jax.random.PRNGKey(0)
    k1, k2, k3, k4, k5 = jax.random.split(key, 5)

    conv_out_depth, n_depth = 16, 32
    n_atoms_per_mol = [40, 29, 35, 53]            # 157 atoms, 4 molecules
    n_mols = len(n_atoms_per_mol)
    total_atoms = sum(n_atoms_per_mol)
    n_g = len(GAUSSIAN_MEMBERSHIPS)

    outputs = jax.random.normal(k1, (total_atoms, conv_out_depth), jnp.float32)
    pair_features = jax.random.normal(k2, (12, 8), jnp.float32)  # passthrough
    # Molecule id per atom, deliberately shuffled (scatter_add is order-free).
    atom_split_np = np.repeat(np.arange(n_mols, dtype=np.int32), n_atoms_per_mol)
    atom_split_np = np.asarray(
        jax.random.permutation(k5, jnp.asarray(atom_split_np)), np.int32)

    # Linear(conv_out_depth*11 -> n_depth), torch layout (out_features, in_features).
    w = 0.03 * jax.random.normal(k3, (n_depth, conv_out_depth * n_g), jnp.float32)
    b = 0.03 * jax.random.normal(k4, (n_depth,), jnp.float32)

    ref = _reference(np.asarray(outputs), atom_split_np, n_mols,
                     np.asarray(w), np.asarray(b), EPSILON)

    # tm=128 exercises multiple grid steps + a ragged last block (157 = 128 + 29);
    # tm=2048 (production default) exercises the multi-chunk inner loop with
    # fully-masked trailing chunks.
    for tm in (128, 2048):
        out, pf = weave_gather(outputs, pair_features, jnp.asarray(atom_split_np),
                               n_mols, w, b, gaussian_expand=True, tm=tm)
        out = jax.block_until_ready(out)
        assert out.shape == (n_mols, n_depth), out.shape
        # Tolerance covers f32 kernel math vs the f64 reference.
        np.testing.assert_allclose(np.asarray(out), ref, atol=5e-3, rtol=5e-3)
        assert pf.shape == pair_features.shape

    print("KERNEL_OK")
</pallas_src>

<mosaic_0001>
module attributes {stable_mosaic.version = 11 : i64} {
  func.func @kernel(%arg0: i32, %arg1: memref<16x128xf32, #tpu.memory_space<vmem>>, %arg2: memref<1x128xi32, #tpu.memory_space<vmem>>, %arg3: memref<48x32xf32, #tpu.memory_space<vmem>>, %arg4: memref<1x32xf32, #tpu.memory_space<vmem>>, %arg5: memref<8x32xf32, #tpu.memory_space<vmem>>, %arg6: memref<8x48xf32, #tpu.memory_space<vmem>>) attributes {dimension_semantics = [#tpu.dimension_semantics<arbitrary>], iteration_bounds = array<i64: 2>, scalar_prefetch = 0 : i64, scratch_operands = 1 : i64, tpu.core_type = #tpu.core_type<tc>, window_params = [{transform_indices = @transform_0, window_bounds = array<i64: 16, 128>}, {transform_indices = @transform_1, window_bounds = array<i64: 1, 128>}, {pipeline_mode = #tpu.pipeline_mode<synchronous>, transform_indices = @transform_2, window_bounds = array<i64: 48, 32>}, {pipeline_mode = #tpu.pipeline_mode<synchronous>, transform_indices = @transform_3, window_bounds = array<i64: 1, 32>}, {pipeline_mode = #tpu.pipeline_mode<synchronous>, transform_indices = @transform_4, window_bounds = array<i64: 8, 32>}]} {
    %c0_i32 = arith.constant 0 : i32
    %0 = arith.cmpi eq, %arg0, %c0_i32 : i32
    %1 = arith.extui %0 : i1 to i32
    %c0_i32_0 = arith.constant 0 : i32
    %2 = arith.cmpi ne, %1, %c0_i32_0 : i32
    scf.if %2 {
      %cst_14 = arith.constant 0.000000e+00 : f32
      %46 = vector.broadcast %cst_14 : f32 to vector<8x48xf32>
      %c0_15 = arith.constant 0 : index
      %c0_16 = arith.constant 0 : index
      %47 = vector.load %arg6[%c0_15, %c0_16] : memref<8x48xf32, #tpu.memory_space<vmem>>, vector<8x48xf32>
      tpu.vector_store %arg6[%c0_15, %c0_16], %46 {strides = array<i32>} : memref<8x48xf32, #tpu.memory_space<vmem>>, vector<8x48xf32>,
    } else {
    }
    %c0_i32_1 = arith.constant 0 : i32
    %c128_i32 = arith.constant 128 : i32
    %3 = arith.muli %c0_i32_1, %c128_i32 : i32
    %4 = tpu.assume_multiple %3, 128 : i32
    %5 = tpu.iota {dimensions = array<i32: 1>} : vector<1x128xi32>
    %c128_i32_2 = arith.constant 128 : i32
    %6 = arith.muli %arg0, %c128_i32_2 : i32
    %7 = arith.addi %6, %4 : i32
    %8 = vector.broadcast %7 : i32 to vector<1x128xi32>
    %9 = arith.addi %8, %5 : vector<1x128xi32>
    %c157_i32 = arith.constant 157 : i32
    %10 = vector.broadcast %c157_i32 : i32 to vector<1x128xi32>
    %11 = arith.cmpi slt, %9, %10 : vector<1x128xi32>
    %c0 = arith.constant 0 : index
    %12 = arith.index_cast %4 : i32 to index
    %13 = vector.load %arg1[%c0, %12] : memref<16x128xf32, #tpu.memory_space<vmem>>, vector<16x128xf32>
    %cst = arith.constant 0.000000e+00 : f32
    %14 = vector.shape_cast %11 : vector<1x128xi1> to vector<1x128xi1>
    %15 = vector.broadcast %14 : vector<1x128xi1> to vector<16x128xi1>
    %16 = vector.broadcast %cst : f32 to vector<16x128xf32>
    %17 = arith.select %15, %13, %16 : vector<16x128xi1>, vector<16x128xf32>
    %18 = arith.mulf %17, %17 : vector<16x128xf32>
    %cst_3 = arith.constant -279.076202 : f32
    %19 = vector.broadcast %cst_3 : f32 to vector<16x128xf32>
    %20 = arith.mulf %19, %18 : vector<16x128xf32>
    %cst_4 = arith.constant 2.13162821E-14 : f32
    %21 = vector.broadcast %cst_4 : f32 to vector<16x128xf32>
    %22 = arith.mulf %21, %17 : vector<16x128xf32>
    %23 = arith.addf %20, %22 : vector<16x128xf32>
    %cst_5 = arith.constant -178.699188 : f32
    %24 = vector.broadcast %cst_5 : f32 to vector<16x128xf32>
    %25 = arith.addf %23, %24 : vector<16x128xf32>
    %26 = tpu.reciprocal %25 : vector<16x128xf32> -> vector<16x128xf32>
    %27 = arith.mulf %18, %26 : vector<16x128xf32>
    %28 = arith.mulf %17, %26 : vector<16x128xf32>
    %29 = tpu.concatenate %27, %28, %26 in 0 : vector<16x128xf32>, vector<16x128xf32>, vector<16x128xf32> -> vector<48x128xf32>
    %c0_6 = arith.constant 0 : index
    %30 = arith.index_cast %4 : i32 to index
    %31 = vector.load %arg2[%c0_6, %30] : memref<1x128xi32, #tpu.memory_space<vmem>>, vector<1x128xi32>
    %c8_i32 = arith.constant 8 : i32
    %32 = vector.broadcast %c8_i32 : i32 to vector<1x128xi32>
    %33 = arith.select %11, %31, %32 : vector<1x128xi1>, vector<1x128xi32>
    %34 = tpu.iota {dimensions = array<i32: 0>} : vector<8x128xi32>
    %35 = vector.broadcast %33 : vector<1x128xi32> to vector<8x128xi32>
    %36 = arith.cmpi eq, %34, %35 : vector<8x128xi32>
    %37 = arith.extui %36 : vector<8x128xi1> to vector<8x128xi32>
    %38 = arith.sitofp %37 : vector<8x128xi32> to vector<8x128xf32>
    %c0_7 = arith.constant 0 : index
    %c0_8 = arith.constant 0 : index
    %39 = vector.load %arg6[%c0_7, %c0_8] : memref<8x48xf32, #tpu.memory_space<vmem>>, vector<8x48xf32>
    %cst_9 = arith.constant dense<0.000000e+00> : vector<8x48xf32>
    %40 = tpu.matmul %38, %29, %cst_9 {dimension_numbers = #tpu.dot_dimension_numbers<[1], [1], [0], [0], [0, 0, 1, 0], [], []>} : vector<8x128xf32>, vector<48x128xf32>, vector<8x48xf32> -> vector<8x48xf32>
    %41 = arith.addf %39, %40 : vector<8x48xf32>
    %c0_10 = arith.constant 0 : index
    %c0_11 = arith.constant 0 : index
    %42 = vector.load %arg6[%c0_10, %c0_11] : memref<8x48xf32, #tpu.memory_space<vmem>>, vector<8x48xf32>
    tpu.vector_store %arg6[%c0_10, %c0_11], %41 {strides = array<i32>} : memref<8x48xf32, #tpu.memory_space<vmem>>, vector<8x48xf32>,
    %c1_i32 = arith.constant 1 : i32
    %c1_i32_12 = arith.constant 1 : i32
    %43 = arith.cmpi eq, %arg0, %c1_i32_12 : i32
    %44 = arith.extui %43 : i1 to i32
    %c0_i32_13 = arith.constant 0 : i32
    %45 = arith.cmpi ne, %44, %c0_i32_13 : i32
    scf.if %45 {
      %c0_14 = arith.constant 0 : index
      %c0_15 = arith.constant 0 : index
      %46 = vector.load %arg6[%c0_14, %c0_15] : memref<8x48xf32, #tpu.memory_space<vmem>>, vector<8x48xf32>
      %c0_16 = arith.constant 0 : index
      %c0_17 = arith.constant 0 : index
      %47 = vector.load %arg3[%c0_16, %c0_17] : memref<48x32xf32, #tpu.memory_space<vmem>>, vector<48x32xf32>
      %cst_18 = arith.constant dense<0.000000e+00> : vector<8x32xf32>
      %48 = tpu.matmul %46, %47, %cst_18 {dimension_numbers = #tpu.dot_dimension_numbers<[1], [0], [0], [1], [0, 0, 1, 1], [], []>} : vector<8x48xf32>, vector<48x32xf32>, vector<8x32xf32> -> vector<8x32xf32>
      %c0_19 = arith.constant 0 : index
      %c0_20 = arith.constant 0 : index
      %49 = vector.load %arg4[%c0_19, %c0_20] : memref<1x32xf32, #tpu.memory_space<vmem>>, vector<1x32xf32>
      %50 = vector.broadcast %49 : vector<1x32xf32> to vector<8x32xf32>
      %51 = arith.addf %48, %50 : vector<8x32xf32>
      %52 = math.tanh %51 : vector<8x32xf32>
      %c0_21 = arith.constant 0 : index
      %c0_22 = arith.constant 0 : index
      %53 = vector.load %arg5[%c0_21, %c0_22] : memref<8x32xf32, #tpu.memory_space<vmem>>, vector<8x32xf32>
      tpu.vector_store %arg5[%c0_21, %c0_22], %52 {strides = array<i32>} : memref<8x32xf32, #tpu.memory_space<vmem>>, vector<8x32xf32>,
    } else {
    }
    return
  }
  func.func @transform_0(%arg0: i32) -> (i32, i32) {
    %c0_i32 = arith.constant 0 : i32
    %c0_i32_0 = arith.constant 0 : i32
    return %c0_i32, %arg0 : i32, i32
  }
  func.func @transform_1(%arg0: i32) -> (i32, i32) {
    %c0_i32 = arith.constant 0 : i32
    %c0_i32_0 = arith.constant 0 : i32
    return %c0_i32, %arg0 : i32, i32
  }
  func.func @transform_2(%arg0: i32) -> (i32, i32) {
    %c0_i32 = arith.constant 0 : i32
    %c0_i32_0 = arith.constant 0 : i32
    %c0_i32_1 = arith.constant 0 : i32
    return %c0_i32, %c0_i32_0 : i32, i32
  }
  func.func @transform_3(%arg0: i32) -> (i32, i32) {
    %c0_i32 = arith.constant 0 : i32
    %c0_i32_0 = arith.constant 0 : i32
    %c0_i32_1 = arith.constant 0 : i32
    return %c0_i32, %c0_i32_0 : i32, i32
  }
  func.func @transform_4(%arg0: i32) -> (i32, i32) {
    %c0_i32 = arith.constant 0 : i32
    %c0_i32_0 = arith.constant 0 : i32
    %c0_i32_1 = arith.constant 0 : i32
    return %c0_i32, %c0_i32_0 : i32, i32
  }
}

</mosaic_0001>

<llo_original>
// kernel: tpu_custom_call.1
$region0: #{tpu_custom_call.1}
  #allocation0 [shape = 'u32[]', space=smem, size = 0x4, offset = 0x4, fixed_abs, tag = 'smem constant byte address 0x4 - core index']
  #allocation1 [shape = 'u32[144,128]{1,0:T(1,128)}', space=vmem, size = 0x12000, scoped, tag = 'internal scratch']
  #allocation2 [shape = 'f32[8,48]{1,0:T(8,128)}', space=vmem, size = 0x1000, scoped, tag = 'scratch operand']
  %s0 = inlined_call_operand.vmem [shape: f32[16,157], index: 0, kind: input, shape index: {}]
  %s1 = inlined_call_operand.vmem [shape: s32[1,157], index: 1, kind: input, shape index: {}]
  %s2 = inlined_call_operand.vmem [shape: f32[48,32], index: 2, kind: input, shape index: {}]
  %s3 = inlined_call_operand.vmem [shape: f32[1,32], index: 3, kind: input, shape index: {}]
  %s4 = inlined_call_operand.hbm [shape: f32[8,32], index: 4, kind: output, shape index: {}]
  %s5 = sld [smem:[#allocation0]]
  $region95: #{tpu_custom_call.1} parent=0
    _
  %s7 = ssub.s32 1, %s5
  %s8 = scalar_select 0, %s7, %s5
  $region1: #{tpu_custom_call.1} parent=0
    #allocation3 [shape = 'u8[16384]{0}', space=vmem, size = 0x4000, scoped, tag = 'input window, operand 0']
    #allocation4 [shape = 'u8[4096]{0}', space=vmem, size = 0x1000, scoped, tag = 'output window, operand 0, single buffered']
    #allocation5 [shape = 's32[2]{0}', space=sflag, size = 0x8, scoped, tag = 'scoped memory for tpu_custom_call.1']
    %9 = vsyncpa [#allocation5], 0
    loop: start=0, step=1, limit=4
    $region2: #{tpu_custom_call.1} parent=1 // loop_pre_header
      _
    $region3: #{tpu_custom_call.1} parent=1 // loop_header
      %s11 = sphi 0, %s15
      %p12 = scmp.ge.s32.totalorder %s11, 4
      %s21 = sphi 0, %s23
      %s24 = sphi 0, %s21
      %s25 = sphi 0, %s24
      %s41 = sphi 0, %s25
      %s47 = sphi 0, %s49
      %s50 = sphi 0, %s47
      %s51 = sphi 0, %s50
      %s67 = sphi 0, %s51
      %s71 = sphi 0, %s71
      %s73 = sphi 0, %s71
      %s74 = sphi 0, %s73
      %s88 = sphi 0, %s74
      %s92 = sphi 0, %s92
      %s94 = sphi 0, %s92
      %s95 = sphi 0, %s94
      %s109 = sphi 0, %s95
      %s113 = sphi 0, %s113
      %s115 = sphi 0, %s113
      %s116 = sphi 0, %s115
      %s130 = sphi 0, %s116
    $region4: #{tpu_custom_call.1} parent=1 // loop_header_branch
      %14 = sbr.rel (%p12) target = $region8
    $region5: #{tpu_custom_call.1} parent=1 // loop_body
      %s16 = ssub.s32 %s11, 1
      %s17 = ssub.s32 %s11, 2
      %s18 = sadd.s32 %s11, 1
      %s19 = ssub.s32 %s11, %s18
      %p20 = scmp.eq.s32.totalorder %s19, 0
      %s22 = sadd.s32 %s21, 1
      %s23 = scalar_select %p20, %s21, %s22
      %p26 = pneg %p20
      %p27 = scmp.eq.s32.totalorder %s11, 1
      %p28 = por %p26, %p27
      %p29 = scmp.ne.s32.totalorder %s21, %s24
      %p30 = scmp.eq.s32.totalorder %s11, 0
      %p31 = por %p29, %p30
      %p32 = scmp.ne.s32.totalorder %s21, %s24
      %p33 = scmp.eq.s32.totalorder %s16, 1
      %p34 = por %p32, %p33
      %p35 = scmp.ne.s32.totalorder %s24, %s25
      %p36 = scmp.eq.s32.totalorder %s16, 0
      %p37 = por %p35, %p36
      %p38 = scmp.ne.s32.totalorder %s24, %s25
      %p39 = scmp.eq.s32.totalorder %s17, 1
      %p40 = por %p38, %p39
      %p42 = scmp.ne.s32.totalorder %s25, %s41
      %p43 = scmp.eq.s32.totalorder %s17, 0
      %p44 = por %p42, %p43
      %s45 = ssub.s32 %s11, %s18
      %p46 = scmp.eq.s32.totalorder %s45, 0
      %s48 = sadd.s32 %s47, 1
      %s49 = scalar_select %p46, %s47, %s48
      %p52 = pneg %p46
      %p53 = scmp.eq.s32.totalorder %s11, 1
      %p54 = por %p52, %p53
      %p55 = scmp.ne.s32.totalorder %s47, %s50
      %p56 = scmp.eq.s32.totalorder %s11, 0
      %p57 = por %p55, %p56
      %p58 = scmp.ne.s32.totalorder %s47, %s50
      %p59 = scmp.eq.s32.totalorder %s16, 1
      %p60 = por %p58, %p59
      %p61 = scmp.ne.s32.totalorder %s50, %s51
      %p62 = scmp.eq.s32.totalorder %s16, 0
      %p63 = por %p61, %p62
      %p64 = scmp.ne.s32.totalorder %s50, %s51
      %p65 = scmp.eq.s32.totalorder %s17, 1
      %p66 = por %p64, %p65
      %p68 = scmp.ne.s32.totalorder %s51, %s67
      %p69 = scmp.eq.s32.totalorder %s17, 0
      %p70 = por %p68, %p69
      %s72 = sadd.s32 %s71, 1
      %p75 = scmp.eq.s32.totalorder %s11, 1
      %p76 = scmp.ne.s32.totalorder %s71, %s73
      %p77 = scmp.eq.s32.totalorder %s11, 0
      %p78 = por %p76, %p77
      %p79 = scmp.ne.s32.totalorder %s71, %s73
      %p80 = scmp.eq.s32.totalorder %s16, 1
      %p81 = por %p79, %p80
      %p82 = scmp.ne.s32.totalorder %s73, %s74
      %p83 = scmp.eq.s32.totalorder %s16, 0
      %p84 = por %p82, %p83
      %p85 = scmp.ne.s32.totalorder %s73, %s74
      %p86 = scmp.eq.s32.totalorder %s17, 1
      %p87 = por %p85, %p86
      %p89 = scmp.ne.s32.totalorder %s74, %s88
      %p90 = scmp.eq.s32.totalorder %s17, 0
      %p91 = por %p89, %p90
      %s93 = sadd.s32 %s92, 1
      %p96 = scmp.eq.s32.totalorder %s11, 1
      %p97 = scmp.ne.s32.totalorder %s92, %s94
      %p98 = scmp.eq.s32.totalorder %s11, 0
      %p99 = por %p97, %p98
      %p100 = scmp.ne.s32.totalorder %s92, %s94
      %p101 = scmp.eq.s32.totalorder %s16, 1
      %p102 = por %p100, %p101
      %p103 = scmp.ne.s32.totalorder %s94, %s95
      %p104 = scmp.eq.s32.totalorder %s16, 0
      %p105 = por %p103, %p104
      %p106 = scmp.ne.s32.totalorder %s94, %s95
      %p107 = scmp.eq.s32.totalorder %s17, 1
      %p108 = por %p106, %p107
      %p110 = scmp.ne.s32.totalorder %s95, %s109
      %p111 = scmp.eq.s32.totalorder %s17, 0
      %p112 = por %p110, %p111
      %s114 = sadd.s32 %s113, 1
      %p117 = scmp.eq.s32.totalorder %s11, 1
      %p118 = scmp.ne.s32.totalorder %s113, %s115
      %p119 = scmp.eq.s32.totalorder %s11, 0
      %p120 = por %p118, %p119
      %p121 = scmp.ne.s32.totalorder %s113, %s115
      %p122 = scmp.eq.s32.totalorder %s16, 1
      %p123 = por %p121, %p122
      %p124 = scmp.ne.s32.totalorder %s115, %s116
      %p125 = scmp.eq.s32.totalorder %s16, 0
      %p126 = por %p124, %p125
      %p127 = scmp.ne.s32.totalorder %s115, %s116
      %p128 = scmp.eq.s32.totalorder %s17, 1
      %p129 = por %p127, %p128
      %p131 = scmp.ne.s32.totalorder %s116, %s130
      %p132 = scmp.eq.s32.totalorder %s17, 0
      %p133 = por %p131, %p132
      %p134 = scmp.le.s32.totalorder 1, %s11
      %p135 = scmp.lt.s32.totalorder %s11, 3
      %p136 = pnand %p134, %p135
      %p137 = pneg %p136
      // Predicated region
      $region9: #{tpu_custom_call.1} parent=5 // pred_check
        _
      $region10: #{tpu_custom_call.1} parent=5 // pred_check_branch
        %139 = sbr.rel (%p136) target = $region12
      $region11: #{tpu_custom_call.1} parent=5 // pred_region
        %s140 = ssub.s32 %s11, 1
        // Predicated region
        $region13: #{tpu_custom_call.1} parent=11 // pred_check
          %p141 = pneg %p84
        $region14: #{tpu_custom_call.1} parent=11 // pred_check_branch
          %143 = sbr.rel (%p141) target = $region16
        $region15: #{tpu_custom_call.1} parent=11 // pred_region
          _
        $region16: #{tpu_custom_call.1} parent=11 // pred_fallthru
          _
        // Predicated region
        $region17: #{tpu_custom_call.1} parent=11 // pred_check
          %p144 = pneg %p105
        $region18: #{tpu_custom_call.1} parent=11 // pred_check_branch
          %146 = sbr.rel (%p144) target = $region20
        $region19: #{tpu_custom_call.1} parent=11 // pred_region
          _
        $region20: #{tpu_custom_call.1} parent=11 // pred_fallthru
          _
      $region12: #{tpu_custom_call.1} parent=5 // pred_fallthru
        _
      %p147 = scmp.lt.s32.totalorder %s11, 2
      // Predicated region
      $region21: #{tpu_custom_call.1} parent=5 // pred_check
        %p148 = pneg %p147
      $region22: #{tpu_custom_call.1} parent=5 // pred_check_branch
        %150 = sbr.rel (%p148) target = $region24
      $region23: #{tpu_custom_call.1} parent=5 // pred_region
        // Predicated region
        $region25: #{tpu_custom_call.1} parent=23 // pred_check
          %p151 = pneg %p31
        $region26: #{tpu_custom_call.1} parent=23 // pred_check_branch
          %153 = sbr.rel (%p151) target = $region28
        $region27: #{tpu_custom_call.1} parent=23 // pred_region
          %s154 = sand.u32 %s21, 1
          %s155 = sand.u32 %s21, 1
          %s156 = smul.addr %s155, 16
          %s157 = scalar_lea.vmem [#allocation3], %s156
          %s158 = smul.addr %s11, 8
          %s159 = scalar_lea.vmem %s0, %s158
          // Predicated region
          $region29: #{tpu_custom_call.1} parent=27 // pred_check
            _
          $region30: #{tpu_custom_call.1} parent=27 // pred_check_branch
            %161 = sbr.rel (0) target = $region32
          $region31: #{tpu_custom_call.1} parent=27 // pred_region
            // Predicated region
            $region33: #{tpu_custom_call.1} parent=31 // pred_check
              _
            $region34: #{tpu_custom_call.1} parent=31 // pred_check_branch
              %163 = sbr.rel (0) target = $region36
            $region35: #{tpu_custom_call.1} parent=31 // pred_region
              // Predicated region
              $region48: #{tpu_custom_call.1} parent=35 // pred_check
                _
              $region49: #{tpu_custom_call.1} parent=35 // pred_check_branch
                %181 = sbr.rel (0) target = $region51
              $region50: #{tpu_custom_call.1} parent=35 // pred_region
                loop: start=0, step=1, limit=1
                $region52: #{tpu_custom_call.1} parent=50 // loop_pre_header
                  _
                $region53: #{tpu_custom_call.1} parent=50 // loop_header
                  %s183 = sphi 0, %s187
                  %p184 = scmp.ge.s32.totalorder %s183, 1
                  %s188 = sphi %s159, %s159
                  %s189 = sphi %s157, %s157
                $region54: #{tpu_custom_call.1} parent=50 // loop_header_branch
                  %186 = sbr.rel (%p184) target = $region58
                $region55: #{tpu_custom_call.1} parent=50 // loop_body
                  %v190 = vld [vmem:[%s188] sm:$0xff]
                  %191 = vst [vmem:[%s189] sm:$0xff] %v190
                  %v192 = vld [vmem:[%s188 + $0x10] sm:$0xff]
                  %193 = vst [vmem:[%s189 + $0x8] sm:$0xff] %v192
                $region56: #{tpu_custom_call.1} parent=50 // loop_footer
                  %s187 = sadd.s32 1, %s183
                $region57: #{tpu_custom_call.1} parent=50 // loop_footer_branch
                  %182 = sbr.rel target = $region53
                $region58: #{tpu_custom_call.1} parent=50 // loop_exit
                  _
              $region51: #{tpu_custom_call.1} parent=35 // pred_fallthru
                _
              // Predicated region
              $region59: #{tpu_custom_call.1} parent=35 // pred_check
                _
              $region60: #{tpu_custom_call.1} parent=35 // pred_check_branch
                %195 = sbr.rel target = $region62
              $region61: #{tpu_custom_call.1} parent=35 // pred_region
                _
              $region62: #{tpu_custom_call.1} parent=35 // pred_fallthru
                _
            $region36: #{tpu_custom_call.1} parent=31 // pred_fallthru
              _
            // Predicated region
            $region37: #{tpu_custom_call.1} parent=31 // pred_check
              _
            $region38: #{tpu_custom_call.1} parent=31 // pred_check_branch
              %165 = sbr.rel target = $region40
            $region39: #{tpu_custom_call.1} parent=31 // pred_region
              %s167 = ssub.s32 256, 1
              loop: start=0, step=1, limit=1
              $region41: #{tpu_custom_call.1} parent=39 // loop_pre_header
                _
              $region42: #{tpu_custom_call.1} parent=39 // loop_header
                %s169 = sphi 0, %s173
                %p170 = scmp.ge.s32.totalorder %s169, 1
                %s174 = sphi %s159, %s159
                %s175 = sphi %s157, %s157
              $region43: #{tpu_custom_call.1} parent=39 // loop_header_branch
                %172 = sbr.rel (%p170) target = $region47
              $region44: #{tpu_custom_call.1} parent=39 // loop_body
                %v176 = vld [vmem:[%s174] sm:%s167]
                %177 = vst [vmem:[%s175] sm:%s167] %v176
                %v178 = vld [vmem:[%s174 + $0x10] sm:%s167]
                %179 = vst [vmem:[%s175 + $0x8] sm:%s167] %v178
              $region45: #{tpu_custom_call.1} parent=39 // loop_footer
                %s173 = sadd.s32 1, %s169
              $region46: #{tpu_custom_call.1} parent=39 // loop_footer_branch
                %168 = sbr.rel target = $region42
              $region47: #{tpu_custom_call.1} parent=39 // loop_exit
                _
            $region40: #{tpu_custom_call.1} parent=31 // pred_fallthru
              _
          $region32: #{tpu_custom_call.1} parent=27 // pred_fallthru
            _
          %196 = vnop
        $region28: #{tpu_custom_call.1} parent=23 // pred_fallthru
          _
        // Predicated region
        $region63: #{tpu_custom_call.1} parent=23 // pred_check
          %p197 = pneg %p57
        $region64: #{tpu_custom_call.1} parent=23 // pred_check_branch
          %199 = sbr.rel (%p197) target = $region66
        $region65: #{tpu_custom_call.1} parent=23 // pred_region
          %p200 = scmp.lt.s32.totalorder %s11, 1
          %s201 = scalar_select %p200, %s11, 1
          %s202 = scalar_lea.vmem %s1, %s201
        $region66: #{tpu_custom_call.1} parent=23 // pred_fallthru
          _
      $region24: #{tpu_custom_call.1} parent=5 // pred_fallthru
        _
      %p203 = scmp.le.s32.totalorder 1, %s11
      %p204 = scmp.lt.s32.totalorder %s11, 3
      %p205 = pnand %p203, %p204
      %p206 = pneg %p205
      // Predicated region
      $region67: #{tpu_custom_call.1} parent=5 // pred_check
        _
      $region68: #{tpu_custom_call.1} parent=5 // pred_check_branch
        %208 = sbr.rel (%p205) target = $region70
      $region69: #{tpu_custom_call.1} parent=5 // pred_region
        %s209 = ssub.s32 %s11, 1
        %s210 = sand.u32 %s24, 1
        %s211 = sand.u32 %s24, 1
        %s212 = smul.addr %s211, 16
        %s213 = scalar_lea.vmem [#allocation3], %s212
        // Predicated region
        $region71: #{tpu_custom_call.1} parent=69 // pred_check
          %p214 = pneg %p37
        $region72: #{tpu_custom_call.1} parent=69 // pred_check_branch
          %216 = sbr.rel (%p214) target = $region74
        $region73: #{tpu_custom_call.1} parent=69 // pred_region
          _
        $region74: #{tpu_custom_call.1} parent=69 // pred_fallthru
          _
        %s217 = sand.u32 %s24, 1
        %s218 = sand.u32 %s24, 1
        %s219 = smul.addr %s218, 16
        %s220 = scalar_lea.vmem [#allocation3], %s219
        %p221 = pneg %p37
        %p222 = pneg %p34
        %p223 = scmp.lt.s32.totalorder %s16, 1
        %s224 = scalar_select %p223, %s16, 1
        %s225 = scalar_lea.vmem %s1, %s224
        %p226 = pneg %p63
        %p227 = pneg %p60
        %p228 = pneg %p84
        %p229 = pneg %p81
        %p230 = pneg %p105
        %p231 = pneg %p102
        %p232 = pneg %p126
        %p233 = pneg %p123
        %p234 = scmp.lt.s32.totalorder %s16, 1
        %s235 = scalar_select %p234, %s16, 1
        %s236 = scalar_lea.vmem %s1, %s235
        %p237 = scmp.eq.s32.totalorder %s16, 0
        // Predicated region
        $region75: #{tpu_custom_call.1} parent=69 // pred_check
          %p238 = pneg %p237
        $region76: #{tpu_custom_call.1} parent=69 // pred_check_branch
          %240 = sbr.rel (%p238) target = $region78
        $region77: #{tpu_custom_call.1} parent=69 // pred_region
          %vm241 = vcmask 392192
          %242 = vst.msk [vmem:[#allocation2] sm:$0xff] %vm241, 0.0
        $region78: #{tpu_custom_call.1} parent=69 // pred_fallthru
          _
        %v243 = vlaneseq
        %v244 = vand.u32 %v243, 127
        %s245 = smul.u32 %s16, 128
        %s246 = sadd.s32 %s245, 0
        %v247 = vstv %s246
        %v248 = vadd.s32 %v247, %v244
        %vm249 = vcmp.lt.s32.totalorder %v248, 157
        %v250 = vld [vmem:[%s213] sm:$0xff]
        %v251 = vld [vmem:[%s213 + $0x8] sm:$0xff]
        %v252 = vsel %vm249, 1, 0
        %vm253 = vcmp.eq.s32.totalorder %v252, 1
        %v254 = vsel %vm253, %v250, 0.0
        %v255 = vsel %vm253, %v251, 0.0
        %v256 = vmul.f32 %v254, %v254
        %v257 = vmul.f32 %v255, %v255
        %v258 = vmul.f32 %v256, -279.0762
        %v259 = vmul.f32 %v257, -279.0762
        %v260 = vmul.f32 %v254, 2.1316282e-14
        %v261 = vmul.f32 %v255, 2.1316282e-14
        %v262 = vadd.f32 %v258, %v260
        %v263 = vadd.f32 %v259, %v261
        %v264 = vadd.f32 %v262, -178.69919
        %v265 = vadd.f32 %v263, -178.69919
        %v266 = vrcp.pop %v264
        %v267 = vrcp.pop %v265
        %v268 = vmul.f32 %v256, %v266
        %v269 = vmul.f32 %v257, %v267
        %v270 = vmul.f32 %v254, %v266
        %v271 = vmul.f32 %v255, %v267
        %v272 = vld [vmem:[%s236] sm:$0x1]
        %v273 = vsel %vm249, %v272, 8
        %v274 = vlaneseq
        %v275 = vshrl.u32 %v274, 7
        %v276 = vlaneseq
        %v277 = vshrl.u32 %v276, 7
        %v278 = vsub.s32 0, %v277
        %v279 = vrot.slane %v273, %v278
        %vm280 = vcmp.eq.s32.totalorder %v275, %v279
        %v281 = vsel %vm280, 1, 0
        %v282 = vcvt.s32.f32 %v281
        %v283 = vld [vmem:[#allocation2] sm:$0xff]
        %284 = vmatprep.subr.mxu0 0.0
        %285 = vmatpush1.xpose.msra.mxu0 0.0
        %286 = vmatprep.subr.mxu0 0.0
        %287 = vmatpush1.xpose.msra.mxu0 0.0
        %288 = vmatprep.subr.mxu0 0.0
        %289 = vmatpush1.xpose.msra.mxu0 0.0
        %290 = vmatprep.subr.mxu0 0.0
        %291 = vmatpush1.xpose.msra.mxu0 0.0
        %292 = vmatprep.subr.mxu0 0.0
        %293 = vmatpush1.xpose.msra.mxu0 0.0
        %294 = vmatprep.subr.mxu0 0.0
        %295 = vmatpush1.xpose.msra.mxu0 0.0
        %296 = vmatprep.subr.mxu0 0.0
        %297 = vmatpush1.xpose.msra.mxu0 0.0
        %298 = vmatprep.subr.mxu0 0.0
        %299 = vmatpush1.xpose.msra.mxu0 0.0
        %300 = vmatprep.subr.mxu0 0.0
        %301 = vmatpush1.xpose.msra.mxu0 0.0
        %302 = vmatprep.subr.mxu0 0.0
        %303 = vmatpush1.xpose.msra.mxu0 0.0
        %304 = vmatprep.subr.mxu0 0.0
        %305 = vmatpush1.xpose.msra.mxu0 %v267
        %306 = vmatprep.subr.mxu0 0.0
        %307 = vmatpush1.xpose.msra.mxu0 %v266
        %308 = vmatprep.subr.mxu0 0.0
        %309 = vmatpush1.xpose.msra.mxu0 %v271
        %310 = vmatprep.subr.mxu0 0.0
        %311 = vmatpush1.xpose.msra.mxu0 %v270
        %312 = vmatprep.subr.mxu0 0.0
        %313 = vmatpush1.xpose.msra.mxu0 %v269
        %314 = vmatprep.subr.mxu0 0.0
        %315 = vmatpush1.xpose.msra.mxu0 %v268
        %316 = vmatprep.subr.mxu0 0.0
        %317 = vmatpush2.xpose.msra.mxu0 0.0
        %318 = vmatprep.subr.mxu0 0.0
        %319 = vmatpush2.xpose.msra.mxu0 0.0
        %320 = vmatprep.subr.mxu0 0.0
        %321 = vmatpush2.xpose.msra.mxu0 0.0
        %322 = vmatprep.subr.mxu0 0.0
        %323 = vmatpush2.xpose.msra.mxu0 0.0
        %324 = vmatprep.subr.mxu0 0.0
        %325 = vmatpush2.xpose.msra.mxu0 0.0
        %326 = vmatprep.subr.mxu0 0.0
        %327 = vmatpush2.xpose.msra.mxu0 0.0
        %328 = vmatprep.subr.mxu0 0.0
        %329 = vmatpush2.xpose.msra.mxu0 0.0
        %330 = vmatprep.subr.mxu0 0.0
        %331 = vmatpush2.xpose.msra.mxu0 0.0
        %332 = vmatprep.subr.mxu0 0.0
        %333 = vmatpush2.xpose.msra.mxu0 0.0
        %334 = vmatprep.subr.mxu0 0.0
        %335 = vmatpush2.xpose.msra.mxu0 0.0
        %336 = vmatprep.subr.mxu0 0.0
        %337 = vmatpush2.xpose.msra.mxu0 0.0
        %338 = vmatprep.subr.mxu0 0.0
        %339 = vmatpush2.xpose.msra.mxu0 0.0
        %340 = vmatprep.subr.mxu0 0.0
        %341 = vmatpush2.xpose.msra.mxu0 0.0
        %342 = vmatprep.subr.mxu0 0.0
        %343 = vmatpush2.xpose.msra.mxu0 0.0
        %344 = vmatprep.subr.mxu0 0.0
        %345 = vmatpush2.xpose.msra.mxu0 0.0
        %346 = vmatprep.subr.mxu0 0.0
        %347 = vmatpush2.xpose.msra.mxu0 0.0
        %348 = vmatprep.mubr.f32.mxu0 0.0
        %349 = vmatmul.mubr.f32.gmra.mxu0 %v282
        %v350 = vpop.f32.mrf.mxu0
        %v351 = vadd.f32 0.0, %v350
        %v352 = vpop.f32.mrf.mxu0
        %353 = vdwg.mxu0
        %v354 = vadd.f32 %v283, %v351
        %vm355 = vcmask 392192
        %356 = vst.msk [vmem:[#allocation2] sm:$0xff] %vm355, %v354
        %p357 = scmp.eq.s32.totalorder %s16, 1
        // Predicated region
        $region79: #{tpu_custom_call.1} parent=69 // pred_check
          %p358 = pneg %p357
        $region80: #{tpu_custom_call.1} parent=69 // pred_check_branch
          %360 = sbr.rel (%p358) target = $region82
        $region81: #{tpu_custom_call.1} parent=69 // pred_region
          %v361 = vld [vmem:[#allocation2] sm:$0xff]
          %v362 = vld [vmem:[%s2] sm:$0xff]
          %v363 = vld [vmem:[%s2 + $0x8] sm:$0xff]
          %v364 = vld [vmem:[%s2 + $0x10] sm:$0xff]
          %v365 = vld [vmem:[%s2 + $0x18] sm:$0xff]
          %v366 = vld [vmem:[%s2 + $0x20] sm:$0xff]
          %v367 = vld [vmem:[%s2 + $0x28] sm:$0xff]
          %v368 = vld [vmem:[%s3] sm:$0x1]
          %v370 = vlaneseq
          %v371 = vshrl.u32 %v370, 7
          %v372 = vsub.s32 0, %v371
          %v373 = vrot.slane %v368, %v372
          %v376 = vsel %vm355, %v361, 0
          %378 = vmatprep.subr.mxu0 0.0
          %379 = vmatpush1.msra.mxu0 0.0
          %380 = vmatprep.subr.mxu0 0.0
          %381 = vmatpush1.msra.mxu0 0.0
          %382 = vmatprep.subr.mxu0 0.0
          %383 = vmatpush1.msra.mxu0 0.0
          %384 = vmatprep.subr.mxu0 0.0
          %385 = vmatpush1.msra.mxu0 0.0
          %386 = vmatprep.subr.mxu0 0.0
          %387 = vmatpush1.msra.mxu0 0.0
          %388 = vmatprep.subr.mxu0 0.0
          %389 = vmatpush1.msra.mxu0 0.0
          %390 = vmatprep.subr.mxu0 0.0
          %391 = vmatpush1.msra.mxu0 0.0
          %392 = vmatprep.subr.mxu0 0.0
          %393 = vmatpush1.msra.mxu0 0.0
          %394 = vmatprep.subr.mxu0 0.0
          %395 = vmatpush1.msra.mxu0 0.0
          %396 = vmatprep.subr.mxu0 0.0
          %397 = vmatpush1.msra.mxu0 0.0
          %398 = vmatprep.subr.mxu0 0.0
          %399 = vmatpush1.msra.mxu0 %v367
          %400 = vmatprep.subr.mxu0 0.0
          %401 = vmatpush1.msra.mxu0 %v366
          %402 = vmatprep.subr.mxu0 0.0
          %403 = vmatpush1.msra.mxu0 %v365
          %404 = vmatprep.subr.mxu0 0.0
          %405 = vmatpush1.msra.mxu0 %v364
          %406 = vmatprep.subr.mxu0 0.0
          %407 = vmatpush1.msra.mxu0 %v363
          %408 = vmatprep.subr.mxu0 0.0
          %409 = vmatpush1.msra.mxu0 %v362
          %410 = vmatprep.subr.mxu0 0.0
          %411 = vmatpush2.msra.mxu0 0.0
          %412 = vmatprep.subr.mxu0 0.0
          %413 = vmatpush2.msra.mxu0 0.0
          %414 = vmatprep.subr.mxu0 0.0
          %415 = vmatpush2.msra.mxu0 0.0
          %416 = vmatprep.subr.mxu0 0.0
          %417 = vmatpush2.msra.mxu0 0.0
          %418 = vmatprep.subr.mxu0 0.0
          %419 = vmatpush2.msra.mxu0 0.0
          %420 = vmatprep.subr.mxu0 0.0
          %421 = vmatpush2.msra.mxu0 0.0
          %422 = vmatprep.subr.mxu0 0.0
          %423 = vmatpush2.msra.mxu0 0.0
          %424 = vmatprep.subr.mxu0 0.0
          %425 = vmatpush2.msra.mxu0 0.0
          %426 = vmatprep.subr.mxu0 0.0
          %427 = vmatpush2.msra.mxu0 0.0
          %428 = vmatprep.subr.mxu0 0.0
          %429 = vmatpush2.msra.mxu0 0.0
          %430 = vmatprep.subr.mxu0 0.0
          %431 = vmatpush2.msra.mxu0 0.0
          %432 = vmatprep.subr.mxu0 0.0
          %433 = vmatpush2.msra.mxu0 0.0
          %434 = vmatprep.subr.mxu0 0.0
          %435 = vmatpush2.msra.mxu0 0.0
          %436 = vmatprep.subr.mxu0 0.0
          %437 = vmatpush2.msra.mxu0 0.0
          %438 = vmatprep.subr.mxu0 0.0
          %439 = vmatpush2.msra.mxu0 0.0
          %440 = vmatprep.subr.mxu0 0.0
          %441 = vmatpush2.msra.mxu0 0.0
          %442 = vmatprep.mubr.f32.mxu0 0.0
          %443 = vmatmul.mubr.f32.gmra.mxu0 %v376
          %v444 = vpop.f32.mrf.mxu0
          %v445 = vadd.f32 %v373, %v444
          %v446 = vpop.f32.mrf.mxu0
          %447 = vdwg.mxu0
          %v448 = vtanh.pop %v445
          %vm449 = vcmask 261120
          %450 = vst.msk [vmem:[#allocation4] sm:$0xff] %vm449, %v448
        $region82: #{tpu_custom_call.1} parent=69 // pred_fallthru
          _
        // Predicated region
        $region83: #{tpu_custom_call.1} parent=69 // pred_check
          %p451 = pneg %p123
        $region84: #{tpu_custom_call.1} parent=69 // pred_check_branch
          %453 = sbr.rel (%p451) target = $region86
        $region85: #{tpu_custom_call.1} parent=69 // pred_region
          %s455 = ssub.s32 128, 128
          %456 = vsyncadd [#allocation5], %s455
          %s458 = sshll.u32 [#allocation4], 4
          %s459 = int_to_ptr.vmem [resolvable:$true] %s458
          %461 = dma.vmem_to_hbm [thread:$0]  %s459, 128, %s4, [#allocation5]
        $region86: #{tpu_custom_call.1} parent=69 // pred_fallthru
          _
        // Predicated region
        $region87: #{tpu_custom_call.1} parent=69 // pred_check
          %p462 = pneg %p123
        $region88: #{tpu_custom_call.1} parent=69 // pred_check_branch
          %464 = sbr.rel (%p462) target = $region90
        $region89: #{tpu_custom_call.1} parent=69 // pred_region
          %465 = dma.done [#allocation5], 128
        $region90: #{tpu_custom_call.1} parent=69 // pred_fallthru
          _
      $region70: #{tpu_custom_call.1} parent=5 // pred_fallthru
        _
      %p466 = scmp.le.s32.totalorder 2, %s11
      // Predicated region
      $region91: #{tpu_custom_call.1} parent=5 // pred_check
        %p467 = pneg %p466
      $region92: #{tpu_custom_call.1} parent=5 // pred_check_branch
        %469 = sbr.rel (%p467) target = $region94
      $region93: #{tpu_custom_call.1} parent=5 // pred_region
        %s470 = ssub.s32 %s11, 2
      $region94: #{tpu_custom_call.1} parent=5 // pred_fallthru
        _
    $region6: #{tpu_custom_call.1} parent=1 // loop_footer
      %s15 = sadd.s32 1, %s11
    $region7: #{tpu_custom_call.1} parent=1 // loop_footer_branch
      %10 = sbr.rel target = $region3
    $region8: #{tpu_custom_call.1} parent=1 // loop_exit
      _
    %471 = vsyncpa [#allocation5], 1
    %s472 = scalar_lea.sflag [#allocation5], 1
    %473 = vsyncpa %s472, 1

</llo_original>
